<compile_context>
chip_gen: v7x
topology: tpu7x:2x2x1
jax: 0.10.0
libtpu: 0.0.40
codegen_flags: <defaults>
</compile_context>

<pallas_src>
import jax
import jax.numpy as jnp
from jax.experimental import pallas as pl
from jax.experimental.pallas import tpu as pltpu


def _round_up(x, m):
    return ((x + m - 1) // m) * m


def _cdiv(a, b):
    return (a + b - 1) // b


def _vmem_budget_bytes():
    """Per-generation scoped-VMEM budget (bytes) to size tiles against."""
    cap = None
    try:
        cap = getattr(pltpu.get_tpu_info(), "vmem_capacity_bytes", None)
    except Exception:  # API unavailable / not on TPU — fall back conservatively
        cap = None
    if not cap:
        cap = 64 * 1024 * 1024  # v7x physical VMEM (most restrictive)
    # Leave headroom for Mosaic-internal scratch; cap the request at 100 MiB.
    return min(int(cap * 3 // 4), 100 * 1024 * 1024)


def _make_kernel(ct0, ct1):
    def kernel(x0_ref, x1_ref, w0_ref, w1_ref, b_ref, o_ref):
        j = pl.program_id(1)

        @pl.when(j == 0)
        def _init():
            # Start the (resident, f32) output block from the padded bias row.
            o_ref[...] = jnp.broadcast_to(b_ref[...], o_ref.shape)

        # ---- Path 0: global-avg-pool (1/S0 folded into w0) + projection. ----
        p0 = jnp.sum(x0_ref[...], axis=-1, dtype=jnp.float32)       # (nt, ct0)
        c0 = pl.multiple_of(j * ct0, 8)
        o_ref[...] += jnp.dot(p0, w0_ref[pl.ds(c0, ct0), :],
                              preferred_element_type=jnp.float32)

        # ---- Path 1. ----
        p1 = jnp.sum(x1_ref[...], axis=-1, dtype=jnp.float32)       # (nt, ct1)
        c1 = pl.multiple_of(j * ct1, 8)
        o_ref[...] += jnp.dot(p1, w1_ref[pl.ds(c1, ct1), :],
                              preferred_element_type=jnp.float32)

    return kernel


def output_layer_forward(inputs, weight, bias, *, chunks=None):
    """OutputLayer forward (eval mode).

    inputs: list of 2 arrays, each (N, C_p, T_p, H_p, W_p), any float dtype.
    weight: (num_classes, sum(dim_in))  (PyTorch nn.Linear layout).
    bias:   (num_classes,).
    chunks: optional override of the channel-chunk count (None = auto-size
            against the VMEM budget).
    Returns (N, num_classes) float32.
    """
    assert len(inputs) == 2, "this kernel is specialized to 2 paths"
    x0, x1 = inputs
    N = x0.shape[0]
    C0, C1 = x0.shape[1], x1.shape[1]
    S0 = x0.shape[2] * x0.shape[3] * x0.shape[4]
    S1 = x1.shape[2] * x1.shape[3] * x1.shape[4]
    num_classes = weight.shape[0]
    assert weight.shape[1] == C0 + C1
    assert x1.shape[0] == N

    # Flatten spatial-temporal dims; keep the native activation dtype on the
    # wire (no f32 up-cast in HBM).
    x0f = x0.reshape(N, C0, S0)
    x1f = x1.reshape(N, C1, S1)
    itemsize = max(jnp.dtype(x0f.dtype).itemsize, jnp.dtype(x1f.dtype).itemsize)

    nc_pad = _round_up(num_classes, 128)  # lane-dense output slab

    # ---- Batch tiling: large tiles, but keep >= 2 batch tiles (v7x 2 cores).
    if N < 8:
        n_tile = N
    elif N >= 64:
        n_tile = 32
    elif N >= 32:
        n_tile = 16
    else:
        n_tile = 8
    n_pad = _round_up(N, n_tile)

    # ---- Channel chunking: SAME chunk count for both paths (balanced DMA),
    # auto-sized so double-buffered activation blocks + resident weights/bias/
    # output block fit the per-generation VMEM budget.
    budget = _vmem_budget_bytes()

    def _plan(kc):
        ct0_ = min(_round_up(_cdiv(C0, kc), 8), _round_up(C0, 8))
        ct1_ = min(_round_up(_cdiv(C1, kc), 8), _round_up(C1, 8))
        act = 2 * n_tile * (ct0_ * S0 + ct1_ * S1) * itemsize  # double-buffered
        resident = (ct0_ * kc + ct1_ * kc + 1 + 2 * n_tile) * nc_pad * 4
        return ct0_, ct1_, act + resident

    if chunks is not None:
        kc = max(int(chunks), 1)
        ct0, ct1, _ = _plan(kc)
    else:
        kc = 1
        ct0, ct1, need = _plan(kc)
        max_kc = max(_cdiv(C0, 8), _cdiv(C1, 8), 1)
        while need > int(budget * 0.8) and kc < max_kc:
            kc += 1
            ct0, ct1, need = _plan(kc)

    c0_pad = ct0 * kc
    c1_pad = ct1 * kc

    # Zero-pad activations only when shapes are not already tile-aligned
    # (production SlowFast head shapes divide cleanly -> no extra HBM pass).
    if n_pad != N or c0_pad != C0:
        x0f = jnp.pad(x0f, ((0, n_pad - N), (0, c0_pad - C0), (0, 0)))
    if n_pad != N or c1_pad != C1:
        x1f = jnp.pad(x1f, ((0, n_pad - N), (0, c1_pad - C1), (0, 0)))

    # ---- Parameter prep (tiny; hoist to param setup / rely on jit caching).
    # Split + transpose W per path, fold the 1/S pooling scale in, zero-pad to
    # (C_pad_p, nc_pad). Padded rows/cols are zero -> no effect on the result.
    w = weight.astype(jnp.float32)
    w0_t = jnp.zeros((c0_pad, nc_pad), jnp.float32)
    w0_t = w0_t.at[:C0, :num_classes].set(w[:, :C0].T / float(S0))
    w1_t = jnp.zeros((c1_pad, nc_pad), jnp.float32)
    w1_t = w1_t.at[:C1, :num_classes].set(w[:, C0:].T / float(S1))
    b2d = jnp.zeros((1, nc_pad), jnp.float32)
    b2d = b2d.at[0, :num_classes].set(bias.astype(jnp.float32))

    grid = (n_pad // n_tile, kc)

    x0_spec = pl.BlockSpec((n_tile, ct0, S0), lambda i, j: (i, j, 0))
    x1_spec = pl.BlockSpec((n_tile, ct1, S1), lambda i, j: (i, j, 0))
    # Weights / bias: full-extent constant-index blocks -> DMA'd once, resident.
    w0_spec = pl.BlockSpec((c0_pad, nc_pad), lambda i, j: (0, 0))
    w1_spec = pl.BlockSpec((c1_pad, nc_pad), lambda i, j: (0, 0))
    b_spec = pl.BlockSpec((1, nc_pad), lambda i, j: (0, 0))
    # Output block index constant over j -> resident f32 accumulator.
    out_spec = pl.BlockSpec((n_tile, nc_pad), lambda i, j: (i, 0))

    cost = pl.CostEstimate(
        flops=int(2 * N * (C0 + C1) * num_classes + N * (C0 * S0 + C1 * S1)),
        transcendentals=0,
        bytes_accessed=int(
            x0f.size * x0f.dtype.itemsize
            + x1f.size * x1f.dtype.itemsize
            + (w0_t.size + w1_t.size + b2d.size) * 4
            + n_pad * nc_pad * 4
        ),
    )

    out = pl.pallas_call(
        _make_kernel(ct0, ct1),
        out_shape=jax.ShapeDtypeStruct((n_pad, nc_pad), jnp.float32),
        grid_spec=pltpu.PrefetchScalarGridSpec(
            num_scalar_prefetch=0,
            grid=grid,
            in_specs=[x0_spec, x1_spec, w0_spec, w1_spec, b_spec],
            out_specs=out_spec,
        ),
        compiler_params=pltpu.CompilerParams(
            dimension_semantics=("parallel", "arbitrary"),
            vmem_limit_bytes=budget,
        ),
        cost_estimate=cost,
    )(x0f, x1f, w0_t, w1_t, b2d)

    return out[:N, :num_classes]


if __name__ == "__main__":
    # Small shapes consistent with the module: two paths with different C / T.
    N = 2
    dim_in = [16, 32]
    num_classes = 16
    T0, T1, H, W = 4, 8, 8, 8

    key = jax.random.PRNGKey(0)
    k0, k1, kw, kb = jax.random.split(key, 4)
    x0 = jax.random.normal(k0, (N, dim_in[0], T0, H, W), dtype=jnp.float32)
    x1 = jax.random.normal(k1, (N, dim_in[1], T1, H, W), dtype=jnp.float32)
    weight = (
        jax.random.normal(kw, (num_classes, sum(dim_in)), dtype=jnp.float32) * 0.1
    )
    bias = jax.random.normal(kb, (num_classes,), dtype=jnp.float32) * 0.1

    # Pure-JAX reference.
    p0 = jnp.mean(x0, axis=(2, 3, 4))
    p1 = jnp.mean(x1, axis=(2, 3, 4))
    ref = jnp.concatenate([p0, p1], axis=1) @ weight.T + bias

    # 1) Auto-sized chunking (single C step at these tiny shapes).
    out = jax.block_until_ready(output_layer_forward([x0, x1], weight, bias))
    assert out.shape == (N, num_classes)
    err = float(jnp.max(jnp.abs(out - ref)))
    assert err < 1e-4, err

    # 2) Forced multi-chunk grid to exercise the resident-output accumulation
    #    (kc=2: ct0=8, ct1=16 -> both divide exactly, no activation padding).
    out2 = jax.block_until_ready(
        output_layer_forward([x0, x1], weight, bias, chunks=2)
    )
    err2 = float(jnp.max(jnp.abs(out2 - ref)))
    assert err2 < 1e-4, err2

    print("KERNEL_OK")
</pallas_src>

<mosaic_0001>
module attributes {stable_mosaic.version = 11 : i64} {
  func.func @kernel(%arg0: i32, %arg1: i32, %arg2: memref<2x16x256xf32, #tpu.memory_space<vmem>>, %arg3: memref<2x32x512xf32, #tpu.memory_space<vmem>>, %arg4: memref<16x128xf32, #tpu.memory_space<vmem>>, %arg5: memref<32x128xf32, #tpu.memory_space<vmem>>, %arg6: memref<1x128xf32, #tpu.memory_space<vmem>>, %arg7: memref<2x128xf32, #tpu.memory_space<vmem>>) attributes {dimension_semantics = [#tpu.dimension_semantics<parallel>, #tpu.dimension_semantics<arbitrary>], iteration_bounds = array<i64: 1, 1>, scalar_prefetch = 0 : i64, scratch_operands = 0 : i64, tpu.core_type = #tpu.core_type<tc>, window_params = [{transform_indices = @transform_0, window_bounds = array<i64: 2, 16, 256>}, {transform_indices = @transform_1, window_bounds = array<i64: 2, 32, 512>}, {pipeline_mode = #tpu.pipeline_mode<synchronous>, transform_indices = @transform_2, window_bounds = array<i64: 16, 128>}, {pipeline_mode = #tpu.pipeline_mode<synchronous>, transform_indices = @transform_3, window_bounds = array<i64: 32, 128>}, {pipeline_mode = #tpu.pipeline_mode<synchronous>, transform_indices = @transform_4, window_bounds = array<i64: 1, 128>}, {transform_indices = @transform_5, window_bounds = array<i64: 2, 128>}]} {
    %c0_i32 = arith.constant 0 : i32
    %0 = arith.cmpi eq, %arg1, %c0_i32 : i32
    %1 = arith.extui %0 : i1 to i32
    %c0_i32_0 = arith.constant 0 : i32
    %2 = arith.cmpi ne, %1, %c0_i32_0 : i32
    scf.if %2 {
      %c0_19 = arith.constant 0 : index
      %c0_20 = arith.constant 0 : index
      %23 = vector.load %arg6[%c0_19, %c0_20] : memref<1x128xf32, #tpu.memory_space<vmem>>, vector<1x128xf32>
      %24 = vector.shape_cast %23 : vector<1x128xf32> to vector<1x128xf32>
      %25 = vector.broadcast %24 : vector<1x128xf32> to vector<2x128xf32>
      %c0_21 = arith.constant 0 : index
      %c0_22 = arith.constant 0 : index
      %26 = vector.load %arg7[%c0_21, %c0_22] : memref<2x128xf32, #tpu.memory_space<vmem>>, vector<2x128xf32>
      tpu.vector_store %arg7[%c0_21, %c0_22], %25 {strides = array<i32>} : memref<2x128xf32, #tpu.memory_space<vmem>>, vector<2x128xf32>,
    } else {
    }
    %c0 = arith.constant 0 : index
    %c0_1 = arith.constant 0 : index
    %c0_2 = arith.constant 0 : index
    %3 = vector.load %arg2[%c0, %c0_1, %c0_2] : memref<2x16x256xf32, #tpu.memory_space<vmem>>, vector<2x16x256xf32>
    %cst = arith.constant dense<0.000000e+00> : vector<2x16xf32>
    %4 = vector.multi_reduction <add>, %3, %cst [2] : vector<2x16x256xf32> to vector<2x16xf32>
    %c16_i32 = arith.constant 16 : i32
    %5 = arith.muli %arg1, %c16_i32 : i32
    %6 = tpu.assume_multiple %5, 8 : i32
    %c0_3 = arith.constant 0 : index
    %c0_4 = arith.constant 0 : index
    %7 = vector.load %arg7[%c0_3, %c0_4] : memref<2x128xf32, #tpu.memory_space<vmem>>, vector<2x128xf32>
    %8 = arith.index_cast %6 : i32 to index
    %c0_5 = arith.constant 0 : index
    %9 = vector.load %arg4[%8, %c0_5] : memref<16x128xf32, #tpu.memory_space<vmem>>, vector<16x128xf32>
    %cst_6 = arith.constant dense<0.000000e+00> : vector<2x128xf32>
    %10 = tpu.matmul %4, %9, %cst_6 {dimension_numbers = #tpu.dot_dimension_numbers<[1], [0], [0], [1], [0, 0, 1, 1], [], []>} : vector<2x16xf32>, vector<16x128xf32>, vector<2x128xf32> -> vector<2x128xf32>
    %11 = arith.addf %7, %10 : vector<2x128xf32>
    %c0_7 = arith.constant 0 : index
    %c0_8 = arith.constant 0 : index
    %12 = vector.load %arg7[%c0_7, %c0_8] : memref<2x128xf32, #tpu.memory_space<vmem>>, vector<2x128xf32>
    tpu.vector_store %arg7[%c0_7, %c0_8], %11 {strides = array<i32>} : memref<2x128xf32, #tpu.memory_space<vmem>>, vector<2x128xf32>,
    %c0_9 = arith.constant 0 : index
    %c0_10 = arith.constant 0 : index
    %c0_11 = arith.constant 0 : index
    %13 = vector.load %arg3[%c0_9, %c0_10, %c0_11] : memref<2x32x512xf32, #tpu.memory_space<vmem>>, vector<2x32x512xf32>
    %cst_12 = arith.constant dense<0.000000e+00> : vector<2x32xf32>
    %14 = vector.multi_reduction <add>, %13, %cst_12 [2] : vector<2x32x512xf32> to vector<2x32xf32>
    %c32_i32 = arith.constant 32 : i32
    %15 = arith.muli %arg1, %c32_i32 : i32
    %16 = tpu.assume_multiple %15, 8 : i32
    %c0_13 = arith.constant 0 : index
    %c0_14 = arith.constant 0 : index
    %17 = vector.load %arg7[%c0_13, %c0_14] : memref<2x128xf32, #tpu.memory_space<vmem>>, vector<2x128xf32>
    %18 = arith.index_cast %16 : i32 to index
    %c0_15 = arith.constant 0 : index
    %19 = vector.load %arg5[%18, %c0_15] : memref<32x128xf32, #tpu.memory_space<vmem>>, vector<32x128xf32>
    %cst_16 = arith.constant dense<0.000000e+00> : vector<2x128xf32>
    %20 = tpu.matmul %14, %19, %cst_16 {dimension_numbers = #tpu.dot_dimension_numbers<[1], [0], [0], [1], [0, 0, 1, 1], [], []>} : vector<2x32xf32>, vector<32x128xf32>, vector<2x128xf32> -> vector<2x128xf32>
    %21 = arith.addf %17, %20 : vector<2x128xf32>
    %c0_17 = arith.constant 0 : index
    %c0_18 = arith.constant 0 : index
    %22 = vector.load %arg7[%c0_17, %c0_18] : memref<2x128xf32, #tpu.memory_space<vmem>>, vector<2x128xf32>
    tpu.vector_store %arg7[%c0_17, %c0_18], %21 {strides = array<i32>} : memref<2x128xf32, #tpu.memory_space<vmem>>, vector<2x128xf32>,
    return
  }
  func.func @transform_0(%arg0: i32, %arg1: i32) -> (i32, i32, i32) {
    %c0_i32 = arith.constant 0 : i32
    %c0_i32_0 = arith.constant 0 : i32
    return %arg0, %arg1, %c0_i32 : i32, i32, i32
  }
  func.func @transform_1(%arg0: i32, %arg1: i32) -> (i32, i32, i32) {
    %c0_i32 = arith.constant 0 : i32
    %c0_i32_0 = arith.constant 0 : i32
    return %arg0, %arg1, %c0_i32 : i32, i32, i32
  }
  func.func @transform_2(%arg0: i32, %arg1: i32) -> (i32, i32) {
    %c0_i32 = arith.constant 0 : i32
    %c0_i32_0 = arith.constant 0 : i32
    %c0_i32_1 = arith.constant 0 : i32
    return %c0_i32, %c0_i32_0 : i32, i32
  }
  func.func @transform_3(%arg0: i32, %arg1: i32) -> (i32, i32) {
    %c0_i32 = arith.constant 0 : i32
    %c0_i32_0 = arith.constant 0 : i32
    %c0_i32_1 = arith.constant 0 : i32
    return %c0_i32, %c0_i32_0 : i32, i32
  }
  func.func @transform_4(%arg0: i32, %arg1: i32) -> (i32, i32) {
    %c0_i32 = arith.constant 0 : i32
    %c0_i32_0 = arith.constant 0 : i32
    %c0_i32_1 = arith.constant 0 : i32
    return %c0_i32, %c0_i32_0 : i32, i32
  }
  func.func @transform_5(%arg0: i32, %arg1: i32) -> (i32, i32) {
    %c0_i32 = arith.constant 0 : i32
    %c0_i32_0 = arith.constant 0 : i32
    return %arg0, %c0_i32 : i32, i32
  }
}

</mosaic_0001>

<llo_original>
// kernel: tpu_custom_call.1
$region0: #{tpu_custom_call.1}
  #allocation0 [shape = 'u32[]', space=smem, size = 0x4, offset = 0x4, fixed_abs, tag = 'smem constant byte address 0x4 - core index']
  #allocation1 [shape = 'u32[144,128]{1,0:T(1,128)}', space=vmem, size = 0x12000, scoped, tag = 'internal scratch']
  %s0 = inlined_call_operand.hbm [shape: f32[2,16,256], index: 0, kind: input, shape index: {}]
  %s1 = inlined_call_operand.hbm [shape: f32[2,32,512], index: 1, kind: input, shape index: {}]
  %s2 = inlined_call_operand.hbm [shape: f32[16,128], index: 2, kind: input, shape index: {}]
  %s3 = inlined_call_operand.hbm [shape: f32[32,128], index: 3, kind: input, shape index: {}]
  %s4 = inlined_call_operand.vmem [shape: f32[1,128], index: 4, kind: input, shape index: {}]
  %s5 = inlined_call_operand.hbm [shape: f32[2,128], index: 5, kind: output, shape index: {}]
  %s6 = sld [smem:[#allocation0]]
  $region50: #{tpu_custom_call.1} parent=0
    _
  %s8 = ssub.s32 1, %s6
  %s9 = scalar_select 0, %s8, %s6
  $region1: #{tpu_custom_call.1} parent=0
    #allocation2 [shape = 'u8[32768]{0}', space=vmem, size = 0x8000, scoped, tag = 'input window, operand 0, single buffered']
    #allocation3 [shape = 's32[1]{0}', space=sflag, size = 0x4, scoped, tag = 'scoped memory for tpu_custom_call.1']
    #allocation4 [shape = 's32[1]{0}', space=sflag, size = 0x4, scoped, tag = 'scoped memory for tpu_custom_call.1']
    #allocation5 [shape = 'u8[131072]{0}', space=vmem, size = 0x20000, scoped, tag = 'input window, operand 1, single buffered']
    #allocation6 [shape = 's32[1]{0}', space=sflag, size = 0x4, scoped, tag = 'scoped memory for tpu_custom_call.1']
    #allocation7 [shape = 'u8[8192]{0}', space=vmem, size = 0x2000, scoped, tag = 'input window, operand 2, single buffered']
    #allocation8 [shape = 'u8[16384]{0}', space=vmem, size = 0x4000, scoped, tag = 'input window, operand 3, single buffered']
    #allocation9 [shape = 's32[1]{0}', space=sflag, size = 0x4, scoped, tag = 'scoped memory for tpu_custom_call.1']
    #allocation10 [shape = 'u8[1024]{0}', space=vmem, size = 0x400, scoped, tag = 'output window, operand 0, single buffered']
    %10 = vsyncpa [#allocation3], 0
    %11 = vsyncpa [#allocation6], 0
    %12 = vsyncpa [#allocation9], 0
    %13 = vsyncpa [#allocation4], 0
    // Predicated region
    $region2: #{tpu_custom_call.1} parent=1 // pred_check
      _
    $region3: #{tpu_custom_call.1} parent=1 // pred_check_branch
      %15 = sbr.rel (0) target = $region5
    $region4: #{tpu_custom_call.1} parent=1 // pred_region
      %s17 = ssub.s32 1024, 1024
      %18 = vsyncadd [#allocation3], %s17
      %s19 = sshll.u32 [#allocation2], 4
      %s20 = int_to_ptr.vmem [resolvable:$true] %s19
      %25 = dma.hbm_to_vmem [thread:$0]  %s0, 1024, %s20, [#allocation3], 256, 256, 16
    $region5: #{tpu_custom_call.1} parent=1 // pred_fallthru
      _
    // Predicated region
    $region6: #{tpu_custom_call.1} parent=1 // pred_check
      _
    $region7: #{tpu_custom_call.1} parent=1 // pred_check_branch
      %27 = sbr.rel (0) target = $region9
    $region8: #{tpu_custom_call.1} parent=1 // pred_region
      %s29 = ssub.s32 4096, 4096
      %30 = vsyncadd [#allocation6], %s29
      %s31 = sshll.u32 [#allocation5], 4
      %s32 = int_to_ptr.vmem [resolvable:$true] %s31
      %37 = dma.hbm_to_vmem [thread:$0]  %s1, 4096, %s32, [#allocation6], 512, 512, 32
    $region9: #{tpu_custom_call.1} parent=1 // pred_fallthru
      _
    // Predicated region
    $region10: #{tpu_custom_call.1} parent=1 // pred_check
      _
    $region11: #{tpu_custom_call.1} parent=1 // pred_check_branch
      %39 = sbr.rel (0) target = $region13
    $region12: #{tpu_custom_call.1} parent=1 // pred_region
      %s41 = ssub.s32 256, 256
      %42 = vsyncadd [#allocation6], %s41
      %s43 = sshll.u32 [#allocation7], 4
      %s44 = int_to_ptr.vmem [resolvable:$true] %s43
      %49 = dma.hbm_to_vmem [thread:$0]  %s2, 256, %s44, [#allocation6], 128, 128, 8
    $region13: #{tpu_custom_call.1} parent=1 // pred_fallthru
      _
    // Predicated region
    $region14: #{tpu_custom_call.1} parent=1 // pred_check
      _
    $region15: #{tpu_custom_call.1} parent=1 // pred_check_branch
      %51 = sbr.rel (0) target = $region17
    $region16: #{tpu_custom_call.1} parent=1 // pred_region
      %s53 = ssub.s32 512, 512
      %54 = vsyncadd [#allocation9], %s53
      %s55 = sshll.u32 [#allocation8], 4
      %s56 = int_to_ptr.vmem [resolvable:$true] %s55
      %61 = dma.hbm_to_vmem [thread:$0]  %s3, 512, %s56, [#allocation9], 128, 128, 8
    $region17: #{tpu_custom_call.1} parent=1 // pred_fallthru
      _
    // Predicated region
    $region18: #{tpu_custom_call.1} parent=1 // pred_check
      _
    $region19: #{tpu_custom_call.1} parent=1 // pred_check_branch
      %63 = sbr.rel (0) target = $region21
    $region20: #{tpu_custom_call.1} parent=1 // pred_region
      _
    $region21: #{tpu_custom_call.1} parent=1 // pred_fallthru
      _
    // Predicated region
    $region22: #{tpu_custom_call.1} parent=1 // pred_check
      _
    $region23: #{tpu_custom_call.1} parent=1 // pred_check_branch
      %65 = sbr.rel (0) target = $region25
    $region24: #{tpu_custom_call.1} parent=1 // pred_region
      %66 = dma.done [#allocation3], 1024
    $region25: #{tpu_custom_call.1} parent=1 // pred_fallthru
      _
    // Predicated region
    $region26: #{tpu_custom_call.1} parent=1 // pred_check
      _
    $region27: #{tpu_custom_call.1} parent=1 // pred_check_branch
      %68 = sbr.rel (0) target = $region29
    $region28: #{tpu_custom_call.1} parent=1 // pred_region
      %69 = dma.done [#allocation6], 4096
    $region29: #{tpu_custom_call.1} parent=1 // pred_fallthru
      _
    // Predicated region
    $region30: #{tpu_custom_call.1} parent=1 // pred_check
      _
    $region31: #{tpu_custom_call.1} parent=1 // pred_check_branch
      %71 = sbr.rel (0) target = $region33
    $region32: #{tpu_custom_call.1} parent=1 // pred_region
      %72 = dma.done [#allocation6], 256
    $region33: #{tpu_custom_call.1} parent=1 // pred_fallthru
      _
    // Predicated region
    $region34: #{tpu_custom_call.1} parent=1 // pred_check
      _
    $region35: #{tpu_custom_call.1} parent=1 // pred_check_branch
      %74 = sbr.rel (0) target = $region37
    $region36: #{tpu_custom_call.1} parent=1 // pred_region
      %75 = dma.done [#allocation9], 512
    $region37: #{tpu_custom_call.1} parent=1 // pred_fallthru
      _
    %p76 = scmp.eq.s32.totalorder 0, 0
    // Predicated region
    $region38: #{tpu_custom_call.1} parent=1 // pred_check
      %p77 = pneg %p76
    $region39: #{tpu_custom_call.1} parent=1 // pred_check_branch
      %79 = sbr.rel (%p77) target = $region41
    $region40: #{tpu_custom_call.1} parent=1 // pred_region
      %v80 = vld [vmem:[%s4] sm:$0x1]
      %v82 = vlaneseq
      %v83 = vshrl.u32 %v82, 7
      %v84 = vsub.s32 0, %v83
      %v85 = vrot.slane %v80, %v84
      %87 = vst [vmem:[#allocation10] sm:$0x3] %v85
    $region41: #{tpu_custom_call.1} parent=1 // pred_fallthru
      _
    %v88 = vld [vmem:[#allocation2] sm:$0xff]
    %v89 = vld [vmem:[#allocation2 + $0x8] sm:$0xff]
    %v90 = vld [vmem:[#allocation2 + $0x10] sm:$0xff]
    %v91 = vld [vmem:[#allocation2 + $0x18] sm:$0xff]
    %v92 = vld [vmem:[#allocation2 + $0x20] sm:$0xff]
    %v93 = vld [vmem:[#allocation2 + $0x28] sm:$0xff]
    %v94 = vld [vmem:[#allocation2 + $0x30] sm:$0xff]
    %v95 = vld [vmem:[#allocation2 + $0x38] sm:$0xff]
    %v96 = vadd.f32 %v88, %v89
    %97 = vadd.xlane.f32.xlu0 %v96
    %v98 = vpop.xlane.xlu0 %97
    %v99 = vadd.f32 %v90, %v91
    %100 = vadd.xlane.f32.xlu0 %v99
    %v101 = vpop.xlane.xlu0 %100
    %v102 = vadd.f32 %v92, %v93
    %103 = vadd.xlane.f32.xlu0 %v102
    %v104 = vpop.xlane.xlu0 %103
    %v105 = vadd.f32 %v94, %v95
    %106 = vadd.xlane.f32.xlu0 %v105
    %v107 = vpop.xlane.xlu0 %106
    %s108 = smul.u32 0, 16
    %v109 = vld [vmem:[#allocation10] sm:$0x3]
    %s110 = scalar_lea.vmem [#allocation7], %s108
    %v111 = vld [vmem:[%s110] sm:$0xff]
    %v112 = vld [vmem:[%s110 + $0x8] sm:$0xff]
    %v117 = vlaneseq
    %v118 = vand.u32 %v117, 127
    %v119 = vlaneseq
    %v120 = vshrl.u32 %v119, 7
    %v121 = vsub.s32 %v118, %v120
    %v122 = vrot.slane %v98, %v121
    %v123 = vadd.s32 %v118, 4294967288
    %v124 = vlaneseq
    %v125 = vshrl.u32 %v124, 7
    %v126 = vsub.s32 %v123, %v125
    %v127 = vrot.slane %v101, %v126
    %vm128 = vcmask 130112
    %v129 = vsel %vm128, %v127, %v122
    %v130 = vlaneseq
    %v131 = vshrl.u32 %v130, 7
    %v132 = vsub.s32 %v118, %v131
    %v133 = vrot.slane %v104, %v132
    %v134 = vlaneseq
    %v135 = vshrl.u32 %v134, 7
    %v136 = vsub.s32 %v123, %v135
    %v137 = vrot.slane %v107, %v136
    %v138 = vsel %vm128, %v137, %v133
    %vm139 = vcmask 1041409
    %v140 = vsel %vm139, %v138, %v129
    %vm141 = vcmask 130048
    %v142 = vsel %vm141, %v140, 0
    %144 = vmatprep.subr.mxu0 0.0
    %145 = vmatpush1.msra.mxu0 %v111
    %146 = vmatprep.subr.mxu0 0.0
    %147 = vmatpush1.msra.mxu0 %v112
    %148 = vmatprep.subr.mxu0 0.0
    %149 = vmatpush1.msra.mxu0 0.0
    %150 = vmatprep.subr.mxu0 0.0
    %151 = vmatpush1.msra.mxu0 0.0
    %152 = vmatprep.subr.mxu0 0.0
    %153 = vmatpush1.msra.mxu0 0.0
    %154 = vmatprep.subr.mxu0 0.0
    %155 = vmatpush1.msra.mxu0 0.0
    %156 = vmatprep.subr.mxu0 0.0
    %157 = vmatpush1.msra.mxu0 0.0
    %158 = vmatprep.subr.mxu0 0.0
    %159 = vmatpush1.msra.mxu0 0.0
    %160 = vmatprep.subr.mxu0 0.0
    %161 = vmatpush1.msra.mxu0 0.0
    %162 = vmatprep.subr.mxu0 0.0
    %163 = vmatpush1.msra.mxu0 0.0
    %164 = vmatprep.subr.mxu0 0.0
    %165 = vmatpush1.msra.mxu0 0.0
    %166 = vmatprep.subr.mxu0 0.0
    %167 = vmatpush1.msra.mxu0 0.0
    %168 = vmatprep.subr.mxu0 0.0
    %169 = vmatpush1.msra.mxu0 0.0
    %170 = vmatprep.subr.mxu0 0.0
    %171 = vmatpush1.msra.mxu0 0.0
    %172 = vmatprep.subr.mxu0 0.0
    %173 = vmatpush1.msra.mxu0 0.0
    %174 = vmatprep.subr.mxu0 0.0
    %175 = vmatpush1.msra.mxu0 0.0
    %176 = vmatprep.subr.mxu0 0.0
    %177 = vmatpush1.msra.mxu0 0.0
    %178 = vmatprep.subr.mxu0 0.0
    %179 = vmatpush1.msra.mxu0 0.0
    %180 = vmatprep.subr.mxu0 0.0
    %181 = vmatpush1.msra.mxu0 0.0
    %182 = vmatprep.subr.mxu0 0.0
    %183 = vmatpush1.msra.mxu0 0.0
    %184 = vmatprep.subr.mxu0 0.0
    %185 = vmatpush1.msra.mxu0 0.0
    %186 = vmatprep.subr.mxu0 0.0
    %187 = vmatpush1.msra.mxu0 0.0
    %188 = vmatprep.subr.mxu0 0.0
    %189 = vmatpush1.msra.mxu0 0.0
    %190 = vmatprep.subr.mxu0 0.0
    %191 = vmatpush1.msra.mxu0 0.0
    %192 = vmatprep.subr.mxu0 0.0
    %193 = vmatpush1.msra.mxu0 0.0
    %194 = vmatprep.subr.mxu0 0.0
    %195 = vmatpush1.msra.mxu0 0.0
    %196 = vmatprep.subr.mxu0 0.0
    %197 = vmatpush1.msra.mxu0 0.0
    %198 = vmatprep.subr.mxu0 0.0
    %199 = vmatpush1.msra.mxu0 0.0
    %200 = vmatprep.subr.mxu0 0.0
    %201 = vmatpush1.msra.mxu0 0.0
    %202 = vmatprep.subr.mxu0 0.0
    %203 = vmatpush1.msra.mxu0 0.0
    %204 = vmatprep.subr.mxu0 0.0
    %205 = vmatpush1.msra.mxu0 0.0
    %206 = vmatprep.subr.mxu0 0.0
    %207 = vmatpush1.msra.mxu0 0.0
    %208 = vmatprep.mubr.f32.mxu0 0.0
    %209 = vmatmul.mubr.f32.gmra.mrb[0].mxu0 %v142
    %v210 = vpop.f32.mrb[0].mxu0
    %v211 = vadd.f32 0.0, %v210
    %v212 = vpop.f32.mrb[0].mxu0
    %213 = vdwg.mxu0
    %v214 = vadd.f32 %v109, %v211
    %215 = vst [vmem:[#allocation10] sm:$0x3] %v214
    %v216 = vld [vmem:[#allocation5] sm:$0xff]
    %v217 = vld [vmem:[#allocation5 + $0x8] sm:$0xff]
    %v218 = vld [vmem:[#allocation5 + $0x10] sm:$0xff]
    %v219 = vld [vmem:[#allocation5 + $0x18] sm:$0xff]
    %v220 = vld [vmem:[#allocation5 + $0x20] sm:$0xff]
    %v221 = vld [vmem:[#allocation5 + $0x28] sm:$0xff]
    %v222 = vld [vmem:[#allocation5 + $0x30] sm:$0xff]
    %v223 = vld [vmem:[#allocation5 + $0x38] sm:$0xff]
    %v224 = vld [vmem:[#allocation5 + $0x40] sm:$0xff]
    %v225 = vld [vmem:[#allocation5 + $0x48] sm:$0xff]
    %v226 = vld [vmem:[#allocation5 + $0x50] sm:$0xff]
    %v227 = vld [vmem:[#allocation5 + $0x58] sm:$0xff]
    %v228 = vld [vmem:[#allocation5 + $0x60] sm:$0xff]
    %v229 = vld [vmem:[#allocation5 + $0x68] sm:$0xff]
    %v230 = vld [vmem:[#allocation5 + $0x70] sm:$0xff]
    %v231 = vld [vmem:[#allocation5 + $0x78] sm:$0xff]
    %v232 = vld [vmem:[#allocation5 + $0x80] sm:$0xff]
    %v233 = vld [vmem:[#allocation5 + $0x88] sm:$0xff]
    %v234 = vld [vmem:[#allocation5 + $0x90] sm:$0xff]
    %v235 = vld [vmem:[#allocation5 + $0x98] sm:$0xff]
    %v236 = vld [vmem:[#allocation5 + $0xa0] sm:$0xff]
    %v237 = vld [vmem:[#allocation5 + $0xa8] sm:$0xff]
    %v238 = vld [vmem:[#allocation5 + $0xb0] sm:$0xff]
    %v239 = vld [vmem:[#allocation5 + $0xb8] sm:$0xff]
    %v240 = vld [vmem:[#allocation5 + $0xc0] sm:$0xff]
    %v241 = vld [vmem:[#allocation5 + $0xc8] sm:$0xff]
    %v242 = vld [vmem:[#allocation5 + $0xd0] sm:$0xff]
    %v243 = vld [vmem:[#allocation5 + $0xd8] sm:$0xff]
    %v244 = vld [vmem:[#allocation5 + $0xe0] sm:$0xff]
    %v245 = vld [vmem:[#allocation5 + $0xe8] sm:$0xff]
    %v246 = vld [vmem:[#allocation5 + $0xf0] sm:$0xff]
    %v247 = vld [vmem:[#allocation5 + $0xf8] sm:$0xff]
    %v248 = vadd.f32 %v216, %v217
    %v249 = vadd.f32 %v248, %v218
    %v250 = vadd.f32 %v249, %v219
    %251 = vadd.xlane.f32.xlu0 %v250
    %v252 = vpop.xlane.xlu0 %251
    %v253 = vadd.f32 %v220, %v221
    %v254 = vadd.f32 %v253, %v222
    %v255 = vadd.f32 %v254, %v223
    %256 = vadd.xlane.f32.xlu0 %v255
    %v257 = vpop.xlane.xlu0 %256
    %v258 = vadd.f32 %v224, %v225
    %v259 = vadd.f32 %v258, %v226
    %v260 = vadd.f32 %v259, %v227
    %261 = vadd.xlane.f32.xlu0 %v260
    %v262 = vpop.xlane.xlu0 %261
    %v263 = vadd.f32 %v228, %v229
    %v264 = vadd.f32 %v263, %v230
    %v265 = vadd.f32 %v264, %v231
    %266 = vadd.xlane.f32.xlu0 %v265
    %v267 = vpop.xlane.xlu0 %266
    %v268 = vadd.f32 %v232, %v233
    %v269 = vadd.f32 %v268, %v234
    %v270 = vadd.f32 %v269, %v235
    %271 = vadd.xlane.f32.xlu0 %v270
    %v272 = vpop.xlane.xlu0 %271
    %v273 = vadd.f32 %v236, %v237
    %v274 = vadd.f32 %v273, %v238
    %v275 = vadd.f32 %v274, %v239
    %276 = vadd.xlane.f32.xlu0 %v275
    %v277 = vpop.xlane.xlu0 %276
    %v278 = vadd.f32 %v240, %v241
    %v279 = vadd.f32 %v278, %v242
    %v280 = vadd.f32 %v279, %v243
    %281 = vadd.xlane.f32.xlu0 %v280
    %v282 = vpop.xlane.xlu0 %281
    %v283 = vadd.f32 %v244, %v245
    %v284 = vadd.f32 %v283, %v246
    %v285 = vadd.f32 %v284, %v247
    %286 = vadd.xlane.f32.xlu0 %v285
    %v287 = vpop.xlane.xlu0 %286
    %s288 = smul.u32 0, 32
    %v289 = vld [vmem:[#allocation10] sm:$0x3]
    %s290 = scalar_lea.vmem [#allocation8], %s288
    %v291 = vld [vmem:[%s290] sm:$0xff]
    %v292 = vld [vmem:[%s290 + $0x8] sm:$0xff]
    %v293 = vld [vmem:[%s290 + $0x10] sm:$0xff]
    %v294 = vld [vmem:[%s290 + $0x18] sm:$0xff]
    %v303 = vlaneseq
    %v304 = vshrl.u32 %v303, 7
    %v305 = vsub.s32 %v118, %v304
    %v306 = vrot.slane %v252, %v305
    %v307 = vlaneseq
    %v308 = vshrl.u32 %v307, 7
    %v309 = vsub.s32 %v123, %v308
    %v310 = vrot.slane %v257, %v309
    %v311 = vsel %vm128, %v310, %v306
    %v312 = vadd.s32 %v118, 4294967280
    %v313 = vlaneseq
    %v314 = vshrl.u32 %v313, 7
    %v315 = vsub.s32 %v312, %v314
    %v316 = vrot.slane %v262, %v315
    %vm317 = vcmask 195712
    %v318 = vsel %vm317, %v316, %v311
    %v319 = vadd.s32 %v118, 4294967272
    %v320 = vlaneseq
    %v321 = vshrl.u32 %v320, 7
    %v322 = vsub.s32 %v319, %v321
    %v323 = vrot.slane %v267, %v322
    %vm324 = vcmask 261312
    %v325 = vsel %vm324, %v323, %v318
    %v326 = vlaneseq
    %v327 = vshrl.u32 %v326, 7
    %v328 = vsub.s32 %v118, %v327
    %v329 = vrot.slane %v272, %v328
    %v330 = vlaneseq
    %v331 = vshrl.u32 %v330, 7
    %v332 = vsub.s32 %v123, %v331
    %v333 = vrot.slane %v277, %v332
    %v334 = vsel %vm128, %v333, %v329
    %v335 = vlaneseq
    %v336 = vshrl.u32 %v335, 7
    %v337 = vsub.s32 %v312, %v336
    %v338 = vrot.slane %v282, %v337
    %v339 = vsel %vm317, %v338, %v334
    %v340 = vlaneseq
    %v341 = vshrl.u32 %v340, 7
    %v342 = vsub.s32 %v319, %v341
    %v343 = vrot.slane %v287, %v342
    %v344 = vsel %vm324, %v343, %v339
    %v345 = vsel %vm139, %v344, %v325
    %vm346 = vcmask 261120
    %v347 = vsel %vm346, %v345, 0
    %349 = vmatprep.subr.mxu0 0.0
    %350 = vmatpush1.msra.mxu0 %v291
    %351 = vmatprep.subr.mxu0 0.0
    %352 = vmatpush1.msra.mxu0 %v292
    %353 = vmatprep.subr.mxu0 0.0
    %354 = vmatpush1.msra.mxu0 %v293
    %355 = vmatprep.subr.mxu0 0.0
    %356 = vmatpush1.msra.mxu0 %v294
    %357 = vmatprep.subr.mxu0 0.0
    %358 = vmatpush1.msra.mxu0 0.0
    %359 = vmatprep.subr.mxu0 0.0
    %360 = vmatpush1.msra.mxu0 0.0
    %361 = vmatprep.subr.mxu0 0.0
    %362 = vmatpush1.msra.mxu0 0.0
    %363 = vmatprep.subr.mxu0 0.0
    %364 = vmatpush1.msra.mxu0 0.0
    %365 = vmatprep.subr.mxu0 0.0
    %366 = vmatpush1.msra.mxu0 0.0
    %367 = vmatprep.subr.mxu0 0.0
    %368 = vmatpush1.msra.mxu0 0.0
    %369 = vmatprep.subr.mxu0 0.0
    %370 = vmatpush1.msra.mxu0 0.0
    %371 = vmatprep.subr.mxu0 0.0
    %372 = vmatpush1.msra.mxu0 0.0
    %373 = vmatprep.subr.mxu0 0.0
    %374 = vmatpush1.msra.mxu0 0.0
    %375 = vmatprep.subr.mxu0 0.0
    %376 = vmatpush1.msra.mxu0 0.0
    %377 = vmatprep.subr.mxu0 0.0
    %378 = vmatpush1.msra.mxu0 0.0
    %379 = vmatprep.subr.mxu0 0.0
    %380 = vmatpush1.msra.mxu0 0.0
    %381 = vmatprep.subr.mxu0 0.0
    %382 = vmatpush1.msra.mxu0 0.0
    %383 = vmatprep.subr.mxu0 0.0
    %384 = vmatpush1.msra.mxu0 0.0
    %385 = vmatprep.subr.mxu0 0.0
    %386 = vmatpush1.msra.mxu0 0.0
    %387 = vmatprep.subr.mxu0 0.0
    %388 = vmatpush1.msra.mxu0 0.0
    %389 = vmatprep.subr.mxu0 0.0
    %390 = vmatpush1.msra.mxu0 0.0
    %391 = vmatprep.subr.mxu0 0.0
    %392 = vmatpush1.msra.mxu0 0.0
    %393 = vmatprep.subr.mxu0 0.0
    %394 = vmatpush1.msra.mxu0 0.0
    %395 = vmatprep.subr.mxu0 0.0
    %396 = vmatpush1.msra.mxu0 0.0
    %397 = vmatprep.subr.mxu0 0.0
    %398 = vmatpush1.msra.mxu0 0.0
    %399 = vmatprep.subr.mxu0 0.0
    %400 = vmatpush1.msra.mxu0 0.0
    %401 = vmatprep.subr.mxu0 0.0
    %402 = vmatpush1.msra.mxu0 0.0
    %403 = vmatprep.subr.mxu0 0.0
    %404 = vmatpush1.msra.mxu0 0.0
    %405 = vmatprep.subr.mxu0 0.0
    %406 = vmatpush1.msra.mxu0 0.0
    %407 = vmatprep.subr.mxu0 0.0
    %408 = vmatpush1.msra.mxu0 0.0
    %409 = vmatprep.subr.mxu0 0.0
    %410 = vmatpush1.msra.mxu0 0.0
    %411 = vmatprep.subr.mxu0 0.0
    %412 = vmatpush1.msra.mxu0 0.0
    %413 = vmatprep.mubr.f32.mxu0 0.0
    %414 = vmatmul.mubr.f32.gmra.mrb[0].mxu0 %v347
    %v415 = vpop.f32.mrb[0].mxu0
    %v416 = vadd.f32 0.0, %v415
    %v417 = vpop.f32.mrb[0].mxu0
    %418 = vdwg.mxu0
    %v419 = vadd.f32 %v289, %v416
    %420 = vst [vmem:[#allocation10] sm:$0x3] %v419
    // Predicated region
    $region42: #{tpu_custom_call.1} parent=1 // pred_check
      _
    $region43: #{tpu_custom_call.1} parent=1 // pred_check_branch
      %422 = sbr.rel (0) target = $region45
    $region44: #{tpu_custom_call.1} parent=1 // pred_region
      %s424 = ssub.s32 32, 32
      %425 = vsyncadd [#allocation4], %s424
      %s427 = sshll.u32 [#allocation10], 4
      %s428 = int_to_ptr.vmem [resolvable:$true] %s427
      %430 = dma.vmem_to_hbm [thread:$0]  %s428, 32, %s5, [#allocation4]
    $region45: #{tpu_custom_call.1} parent=1 // pred_fallthru
      _
    // Predicated region
    $region46: #{tpu_custom_call.1} parent=1 // pred_check
      _
    $region47: #{tpu_custom_call.1} parent=1 // pred_check_branch
      %432 = sbr.rel (0) target = $region49
    $region48: #{tpu_custom_call.1} parent=1 // pred_region
      %433 = dma.done [#allocation4], 32
    $region49: #{tpu_custom_call.1} parent=1 // pred_fallthru
      _
    %434 = vsyncpa [#allocation3], 1
    %435 = vsyncpa [#allocation6], 1
    %436 = vsyncpa [#allocation9], 1
    %437 = vsyncpa [#allocation4], 1

</llo_original>
